<compile_context>
chip_gen: v6e
topology: v6e:2x2x1
jax: 0.10.0
libtpu: 0.0.40
codegen_flags: <defaults>
</compile_context>

<pallas_src>
import functools
import math

import numpy as np

import jax
import jax.numpy as jnp
from jax.experimental import pallas as pl
from jax.experimental.pallas import tpu as pltpu

_LN_EPS = 1e-5
_LEAKY_SLOPE = 0.01


def _round_up(x: int, m: int) -> int:
    return ((x + m - 1) // m) * m


# ---------------------------------------------------------------------------
# Per-generation tuning (v5e / v6e / v7x)
# ---------------------------------------------------------------------------

_TUNE_CACHE = None


def _tune():
    """Tile caps + VMEM budget for the current TPU generation."""
    global _TUNE_CACHE
    if _TUNE_CACHE is not None:
        return _TUNE_CACHE
    gen = None
    try:
        kind = jax.devices()[0].device_kind.lower()
        if "v5" in kind:
            gen = "v5e"
        elif "v6" in kind:
            gen = "v6e"
        elif "v7" in kind or "7x" in kind:
            gen = "v7x"
    except Exception:
        pass
    vmem_cap = (64 << 20) if gen == "v7x" else (128 << 20)
    try:
        vmem_cap = int(pltpu.get_tpu_info().vmem_capacity_bytes)
    except Exception:
        pass
    if gen == "v5e":
        caps = dict(tm=128, tn=256, tk=256)       # 4x128^2 MXU, 1 vst slot
    elif gen == "v6e":
        caps = dict(tm=256, tn=512, tk=512)       # 128 MiB VMEM headroom
    elif gen == "v7x":
        caps = dict(tm=256, tn=256, tk=512)       # only 64 MiB VMEM / TC
    else:
        caps = dict(tm=256, tn=256, tk=256)
    caps["vmem_cap"] = vmem_cap
    caps["vmem_budget"] = min(vmem_cap // 2, 64 << 20)   # v7x -> 32 MiB scoped
    _TUNE_CACHE = caps
    return caps


def _vmem_limit(est_bytes):
    return int(min(max(4 * est_bytes, 8 << 20), _tune()["vmem_budget"]))


# ---------------------------------------------------------------------------
# Epilogue helpers (f32)
# ---------------------------------------------------------------------------

def _act(y, activation):
    if activation == "relu":
        return jnp.maximum(y, 0.0)
    if activation == "leaky_relu":
        return jnp.where(y >= 0, y, _LEAKY_SLOPE * y)
    return y


def _epilogue(y, params, normalization, activation):
    """params rows: 0=bias, 1=gamma, 2=beta."""
    y = y + params[0:1, :]
    if normalization == "layer":
        mean = jnp.mean(y, axis=-1, keepdims=True)
        var = jnp.mean((y - mean) ** 2, axis=-1, keepdims=True)
        y = (y - mean) * jax.lax.rsqrt(var + _LN_EPS)
        y = y * params[1:2, :] + params[2:3, :]
    elif normalization == "batch":
        # Inference-mode BatchNorm1d: running stats folded into scale/shift.
        # TODO(synk): training-mode BatchNorm1d (batch statistics) not implemented.
        y = y * params[1:2, :] + params[2:3, :]
    return _act(y, activation)


# ---------------------------------------------------------------------------
# Kernel 1: tiled LinearBlock   y = act(norm(x @ W + b)),  W already (in, out)
# ---------------------------------------------------------------------------

def _linear_kernel_single_k(x_ref, w_ref, p_ref, o_ref, *, normalization, activation):
    y = jnp.dot(x_ref[...], w_ref[...], preferred_element_type=jnp.float32)
    o_ref[...] = _epilogue(y, p_ref[...], normalization, activation).astype(o_ref.dtype)


def _linear_kernel_multi_k(x_ref, w_ref, p_ref, o_ref, *, normalization, activation):
    k = pl.program_id(2)

    @pl.when(k == 0)
    def _():
        o_ref[...] = jnp.zeros_like(o_ref)

    # f32 output block stays resident across the reduction axis -> accumulate
    # directly into it (no extra VMEM scratch).
    o_ref[...] += jnp.dot(x_ref[...], w_ref[...], preferred_element_type=jnp.float32)

    @pl.when(k == pl.num_programs(2) - 1)
    def _():
        o_ref[...] = _epilogue(o_ref[...], p_ref[...], normalization,
                               activation).astype(o_ref.dtype)


def linear_block(x, w, b, gamma=None, beta=None, *, normalization=None,
                 activation=None, compute_dtype=jnp.bfloat16,
                 w_in_out=False, tk_override=None):
    """y = act(norm(x @ W + b)).

    `w` is in PyTorch nn.Linear (out, in) layout unless w_in_out=True (already
    (in, out)).  The host-side prep transposes/casts/pads ONCE so the kernel's
    MXU contraction needs no in-kernel transpose.  Matmul operands run in
    `compute_dtype` (bf16 default) with f32 accumulation / f32 epilogue.
    """
    caps = _tune()
    tm_max, tn_max = caps["tm"], caps["tn"]
    tk_max = tk_override if tk_override is not None else caps["tk"]

    N, in_feats = x.shape
    if w_in_out:
        in_w, out_feats = w.shape
    else:
        out_feats, in_w = w.shape
    assert in_w == in_feats
    if gamma is None:
        gamma = jnp.ones((out_feats,), jnp.float32)
    if beta is None:
        beta = jnp.zeros((out_feats,), jnp.float32)

    itemsize = jnp.dtype(compute_dtype).itemsize
    row_mult = max(8, 32 // itemsize)           # bf16 packs 16 rows per vreg

    # ---- tile selection ----------------------------------------------------
    if N <= tm_max:
        tm = _round_up(N, row_mult)
        n_pad = tm
    else:
        tm = tm_max
        n_pad = _round_up(N, tm)

    if normalization == "layer":
        out_pad = out_feats            # full row resident for LN statistics
        tn = out_feats
    else:
        out_pad = _round_up(out_feats, 128)     # lane-dense, unmasked stores
        if out_pad <= tn_max:
            tn = out_pad
        else:
            tn = tn_max if out_pad % tn_max == 0 else 128

    if in_feats <= tk_max:
        tk, k_pad = in_feats, in_feats
    else:
        k_pad = _round_up(in_feats, 128)
        tk = tk_max if k_pad % tk_max == 0 else (256 if k_pad % 256 == 0 else 128)

    gm, gn, gk = n_pad // tm, out_pad // tn, k_pad // tk

    # ---- operand prep: cast / pad / one-time W transpose --------------------
    # (For repeated inference this weight prep should be hoisted into one-time
    #  parameter preparation; kept inline for a self-contained demo.)
    xc = x.astype(compute_dtype)
    if (n_pad, k_pad) != (N, in_feats):
        xc = jnp.pad(xc, ((0, n_pad - N), (0, k_pad - in_feats)))
    wt = w if w_in_out else w.T                 # host-side, once
    wc = wt.astype(compute_dtype)
    if (k_pad, out_pad) != (in_feats, out_feats):
        wc = jnp.pad(wc, ((0, k_pad - in_feats), (0, out_pad - out_feats)))
    params = jnp.stack([b.astype(jnp.float32),
                        gamma.astype(jnp.float32),
                        beta.astype(jnp.float32)])
    if out_pad != out_feats:
        params = jnp.pad(params, ((0, 0), (0, out_pad - out_feats)))

    kernel = functools.partial(
        _linear_kernel_single_k if gk == 1 else _linear_kernel_multi_k,
        normalization=normalization, activation=activation)

    cost = pl.CostEstimate(
        flops=2 * n_pad * k_pad * out_pad,
        transcendentals=n_pad if normalization == "layer" else 0,
        bytes_accessed=(n_pad * k_pad + out_pad * k_pad) * itemsize
                       + (n_pad * out_pad + 3 * out_pad) * 4)
    vmem_est = (2 * (tm * tk + tk * tn) * itemsize + 2 * 3 * tn * 4
                + 2 * tm * tn * 4)

    out = pl.pallas_call(
        kernel,
        out_shape=jax.ShapeDtypeStruct((n_pad, out_pad), jnp.float32),
        grid_spec=pltpu.PrefetchScalarGridSpec(
            num_scalar_prefetch=0,
            grid=(gm, gn, gk),                                   # reduction last
            in_specs=[
                pl.BlockSpec((tm, tk), lambda i, j, k: (i, k)),  # x tile
                pl.BlockSpec((tk, tn), lambda i, j, k: (k, j)),  # W tile (in,out)
                pl.BlockSpec((3, tn), lambda i, j, k: (0, j)),   # bias/gamma/beta
            ],
            out_specs=pl.BlockSpec((tm, tn), lambda i, j, k: (i, j)),
        ),
        compiler_params=pltpu.CompilerParams(
            dimension_semantics=("parallel", "parallel", "arbitrary"),
            vmem_limit_bytes=_vmem_limit(vmem_est)),
        cost_estimate=cost,
    )(xc, wc, params)
    return out[:N, :out_feats]


# ---------------------------------------------------------------------------
# Kernel 2: fused two-layer LinearBlock stack
# ---------------------------------------------------------------------------

def _linear_stack2_kernel(x_ref, w1_ref, b1_ref, w2_ref, b2_ref, o_ref, *,
                          act1, act2, compute_dtype):
    h = jnp.dot(x_ref[...], w1_ref[...], preferred_element_type=jnp.float32)
    h = _act(h + b1_ref[...], act1)
    y = jnp.dot(h.astype(compute_dtype), w2_ref[...],
                preferred_element_type=jnp.float32)
    o_ref[...] = _act(y + b2_ref[...], act2).astype(o_ref.dtype)


def linear_stack2(x, w1, b1, w2, b2, *, act1=None, act2=None,
                  compute_dtype=jnp.bfloat16):
    """act2(act1(x @ W1.T + b1) @ W2.T + b2) in a single pallas_call.

    Both (pre-transposed, lane-padded) weights stay resident in VMEM; the
    intermediate activation never round-trips HBM.  Falls back to two tiled
    linear_block calls when the resident weights would not fit comfortably.
    """
    caps = _tune()
    N, K = x.shape
    H1, K1 = w1.shape
    O, H1b = w2.shape
    assert K1 == K and H1b == H1

    itemsize = jnp.dtype(compute_dtype).itemsize
    row_mult = max(8, 32 // itemsize)
    H1_pad = _round_up(H1, 128)
    O_pad = _round_up(O, 128)

    if N <= caps["tm"]:
        tm = _round_up(N, row_mult)
        n_pad = tm
    else:
        tm = caps["tm"]
        n_pad = _round_up(N, tm)

    vmem_est = (2 * itemsize * (tm * K + K * H1_pad + H1_pad * O_pad)
                + 2 * 4 * (H1_pad + O_pad)
                + 2 * 4 * tm * O_pad + 4 * tm * H1_pad)
    if (K > caps["tk"] or O_pad > 2 * caps["tn"]
            or vmem_est > caps["vmem_budget"] // 2):
        y = linear_block(x, w1, b1, activation=act1, compute_dtype=compute_dtype)
        return linear_block(y, w2, b2, activation=act2, compute_dtype=compute_dtype)

    # One-time host-side prep: transpose to (in, out), cast, lane-pad.
    xc = x.astype(compute_dtype)
    if n_pad != N:
        xc = jnp.pad(xc, ((0, n_pad - N), (0, 0)))
    w1c = jnp.pad(w1.T.astype(compute_dtype), ((0, 0), (0, H1_pad - H1)))
    w2c = jnp.pad(w2.T.astype(compute_dtype),
                  ((0, H1_pad - H1), (0, O_pad - O)))
    b1c = jnp.pad(b1.astype(jnp.float32), (0, H1_pad - H1)).reshape(1, H1_pad)
    b2c = jnp.pad(b2.astype(jnp.float32), (0, O_pad - O)).reshape(1, O_pad)

    kernel = functools.partial(_linear_stack2_kernel, act1=act1, act2=act2,
                               compute_dtype=compute_dtype)
    cost = pl.CostEstimate(
        flops=2 * n_pad * (K * H1_pad + H1_pad * O_pad),
        transcendentals=0,
        bytes_accessed=(n_pad * K + K * H1_pad + H1_pad * O_pad) * itemsize
                       + (H1_pad + O_pad + n_pad * O_pad) * 4)

    out = pl.pallas_call(
        kernel,
        out_shape=jax.ShapeDtypeStruct((n_pad, O_pad), jnp.float32),
        grid_spec=pltpu.PrefetchScalarGridSpec(
            num_scalar_prefetch=0,
            grid=(n_pad // tm,),
            in_specs=[
                pl.BlockSpec((tm, K), lambda i: (i, 0)),
                pl.BlockSpec((K, H1_pad), lambda i: (0, 0)),
                pl.BlockSpec((1, H1_pad), lambda i: (0, 0)),
                pl.BlockSpec((H1_pad, O_pad), lambda i: (0, 0)),
                pl.BlockSpec((1, O_pad), lambda i: (0, 0)),
            ],
            out_specs=pl.BlockSpec((tm, O_pad), lambda i: (i, 0)),
        ),
        compiler_params=pltpu.CompilerParams(
            dimension_semantics=("parallel",),
            vmem_limit_bytes=_vmem_limit(vmem_est)),
        cost_estimate=cost,
    )(xc, w1c, b1c, w2c, b2c)
    return out[:N, :O]


# ---------------------------------------------------------------------------
# Kernel 3: per-head message passing * value, fused with head pooling
# ---------------------------------------------------------------------------

def _attn_pool_kernel(p_ref, vcol_ref, vrow_ref, o_ref, msg_ref, *, inv_pool):
    h = pl.program_id(1)
    k = pl.program_id(2)
    nh = pl.num_programs(1)
    nk = pl.num_programs(2)

    @pl.when(jnp.logical_and(h == 0, k == 0))
    def _():
        o_ref[...] = jnp.zeros_like(o_ref)

    @pl.when(k == 0)
    def _():
        msg_ref[...] = jnp.zeros_like(msg_ref)

    # bf16 operands, f32 MXU accumulation.
    msg_ref[...] += jnp.dot(p_ref[0], vcol_ref[0],
                            preferred_element_type=jnp.float32)

    @pl.when(k == nk - 1)
    def _():
        o_ref[...] += msg_ref[...] * vrow_ref[0].astype(jnp.float32)

    if inv_pool != 1.0:
        @pl.when(jnp.logical_and(h == nh - 1, k == nk - 1))
        def _():
            o_ref[...] = o_ref[...] * inv_pool


def attention_message_pool(attn_proj, value, *, head_pooling_type="sum",
                           compute_dtype=jnp.bfloat16):
    """pool_h[(attn_proj[h] @ value[h]) * value[h]] with sum / mean pooling.

    Row-tiled over M (leading 'parallel' axis -> v7x can use both TCs) with a
    bounded inner-M reduction tile; feature dim padded to 128 lanes so the
    MXU RHS and the accumulator stores are lane-dense.
    """
    caps = _tune()
    H, M, M2 = attn_proj.shape
    assert M == M2 and value.shape[:2] == (H, M)
    F = value.shape[2]

    M_pad = _round_up(M, 128)
    F_pad = _round_up(F, 128)
    tm = 256 if (caps["tm"] >= 256 and M_pad % 256 == 0) else 128
    if M_pad % 512 == 0 and caps["tk"] >= 512:
        tkk = 512
    elif M_pad % 256 == 0 and caps["tk"] >= 256:
        tkk = 256
    else:
        tkk = 128

    itemsize = jnp.dtype(compute_dtype).itemsize
    pc = attn_proj.astype(compute_dtype)
    vc = value.astype(compute_dtype)
    if M_pad != M:
        pc = jnp.pad(pc, ((0, 0), (0, M_pad - M), (0, M_pad - M)))
    if (M_pad, F_pad) != (M, F):
        vc = jnp.pad(vc, ((0, 0), (0, M_pad - M), (0, F_pad - F)))

    inv_pool = 1.0 / H if head_pooling_type == "mean" else 1.0
    kernel = functools.partial(_attn_pool_kernel, inv_pool=inv_pool)

    gm, gk = M_pad // tm, M_pad // tkk
    cost = pl.CostEstimate(
        flops=2 * H * M_pad * M_pad * F_pad + 2 * H * M_pad * F_pad,
        transcendentals=0,
        bytes_accessed=(H * M_pad * M_pad + 2 * H * M_pad * F_pad) * itemsize
                       + M_pad * F_pad * 4)
    vmem_est = (2 * (tm * tkk + tkk * F_pad + tm * F_pad) * itemsize
                + 2 * tm * F_pad * 4 + tm * F_pad * 4)

    out = pl.pallas_call(
        kernel,
        out_shape=jax.ShapeDtypeStruct((M_pad, F_pad), jnp.float32),
        grid_spec=pltpu.PrefetchScalarGridSpec(
            num_scalar_prefetch=0,
            grid=(gm, H, gk),        # rows (parallel) / heads / inner reduction
            in_specs=[
                pl.BlockSpec((1, tm, tkk), lambda i, h, k: (h, i, k)),
                pl.BlockSpec((1, tkk, F_pad), lambda i, h, k: (h, k, 0)),
                pl.BlockSpec((1, tm, F_pad), lambda i, h, k: (h, i, 0)),
            ],
            out_specs=pl.BlockSpec((tm, F_pad), lambda i, h, k: (i, 0)),
            scratch_shapes=[pltpu.VMEM((tm, F_pad), jnp.float32)],
        ),
        compiler_params=pltpu.CompilerParams(
            dimension_semantics=("parallel", "arbitrary", "arbitrary"),
            vmem_limit_bytes=_vmem_limit(vmem_est)),
        cost_estimate=cost,
    )(pc, vc, vc)
    return out[:M, :F]


# ---------------------------------------------------------------------------
# Full MutualMultiAttentionHead forward (eval mode)
# ---------------------------------------------------------------------------

def mutual_multi_attention_head_forward(
        g_adj, lg_adj, g_src, g_dst, lg_src, lg_dst,
        node_inputs, edge_inputs, weights, *,
        num_heads, node_in_feats, edge_in_feats,
        message_aggregation_type="sum", head_pooling_type="mean",
        compute_dtype=jnp.bfloat16):
    H = num_heads
    n_nodes = node_inputs.shape[0]
    n_edges = edge_inputs.shape[0]

    def stack(x, name1, name2):
        p1, p2 = weights[name1], weights[name2]
        return linear_stack2(x, p1["w"], p1["b"], p2["w"], p2["b"],
                             act1=p1["activation"], act2=p2["activation"],
                             compute_dtype=compute_dtype)

    def dense_mm(a, rhs):
        # a @ rhs through the linear kernel; rhs is already (in, out) so the
        # w_in_out path needs no transpose at all (zero bias, no activation).
        return linear_block(a, rhs, jnp.zeros((rhs.shape[1],), jnp.float32),
                            normalization=None, activation=None,
                            compute_dtype=compute_dtype, w_in_out=True)

    # ---- query/key and value projections (fused LinearBlock stacks) --------
    # NOTE: the original assigns _node_query_key_linear_2 twice (a bug); the
    # intended two-layer stack (in -> 4H -> H) is implemented here.
    node_qk = stack(dense_mm(g_adj, node_inputs), "node_qk1", "node_qk2")
    node_val = stack(node_inputs, "node_val1", "node_val2")
    node_val = node_val.reshape(H, n_nodes, node_in_feats)    # row-major .view

    edge_qk = stack(dense_mm(lg_adj, edge_inputs), "edge_qk1", "edge_qk2")
    edge_val = stack(edge_inputs, "edge_val1", "edge_val2")
    edge_val = edge_val.reshape(H, n_edges, edge_in_feats)

    # ---- per-head self attention -------------------------------------------
    # H x N is a handful of values (smaller than one vreg tile), so this is
    # plain JAX: a standalone pallas_call here is pure launch overhead.
    node_sa = jax.nn.softmax(node_qk.reshape(H, n_nodes)
                             / math.sqrt(node_in_feats), axis=-1)   # (H, Nn)
    edge_sa = jax.nn.softmax(edge_qk.reshape(H, n_edges)
                             / math.sqrt(edge_in_feats), axis=-1)   # (H, Ne)

    # ---- dense attention projections (data-dependent scatter -> XLA) -------
    # TODO(synk): a sparse gather/segment-sum Pallas path (scalar-prefetched
    # g_src/g_dst indices) would avoid materializing O(H*N^2); kept dense to
    # match the original module's dense-matmul semantics.
    nap = jnp.zeros((H, n_nodes, n_nodes), jnp.float32)
    nap = nap.at[:, g_src, g_dst].set(edge_sa)
    eap = jnp.zeros((H, n_edges, n_edges), jnp.float32)
    eap = eap.at[:, lg_src, lg_dst].set(node_sa[:, g_dst[lg_src]])

    if message_aggregation_type == "mean":
        ndeg = jnp.zeros((n_nodes,), jnp.float32).at[g_dst].add(1.0)
        nap = nap * jnp.where(ndeg > 0, 1.0 / jnp.maximum(ndeg, 1.0),
                              0.0)[None, :, None]
        edeg = jnp.zeros((n_edges,), jnp.float32).at[lg_dst].add(1.0)
        eap = eap * jnp.where(edeg > 0, 1.0 / jnp.maximum(edeg, 1.0),
                              0.0)[None, :, None]
    elif message_aggregation_type != "sum":
        # TODO(synk): 'gcn' aggregation (sqrt of an inverse adjacency, generally
        # singular in the original) is not implemented.
        raise NotImplementedError(message_aggregation_type)

    # ---- message passing * value, head pooling (fused Pallas kernel) -------
    # TODO(synk): dropout is identity in eval mode; training-mode dropout not implemented.
    node_emb = attention_message_pool(nap, node_val,
                                      head_pooling_type=head_pooling_type,
                                      compute_dtype=compute_dtype)
    edge_emb = attention_message_pool(eap, edge_val,
                                      head_pooling_type=head_pooling_type,
                                      compute_dtype=compute_dtype)
    return node_emb, edge_emb


# ---------------------------------------------------------------------------
# Pure-JAX reference of the same forward pass
# ---------------------------------------------------------------------------

def reference_forward(g_adj, lg_adj, g_src, g_dst, lg_src, lg_dst,
                      node_inputs, edge_inputs, weights, *,
                      num_heads, node_in_feats, edge_in_feats,
                      message_aggregation_type="sum", head_pooling_type="mean"):
    H = num_heads
    n_nodes = node_inputs.shape[0]
    n_edges = edge_inputs.shape[0]

    def lin(x, name):
        p = weights[name]
        y = x @ p["w"].T + p["b"]
        if p["activation"] == "relu":
            y = jnp.maximum(y, 0.0)
        elif p["activation"] == "leaky_relu":
            y = jnp.where(y >= 0, y, _LEAKY_SLOPE * y)
        return y

    node_qk = lin(lin(g_adj @ node_inputs, "node_qk1"), "node_qk2")
    node_val = lin(lin(node_inputs, "node_val1"),
                   "node_val2").reshape(H, n_nodes, node_in_feats)
    edge_qk = lin(lin(lg_adj @ edge_inputs, "edge_qk1"), "edge_qk2")
    edge_val = lin(lin(edge_inputs, "edge_val1"),
                   "edge_val2").reshape(H, n_edges, edge_in_feats)

    node_sa = jax.nn.softmax(node_qk.reshape(H, n_nodes)
                             / math.sqrt(node_in_feats), axis=-1)
    edge_sa = jax.nn.softmax(edge_qk.reshape(H, n_edges)
                             / math.sqrt(edge_in_feats), axis=-1)

    nap = jnp.zeros((H, n_nodes, n_nodes), jnp.float32).at[:, g_src, g_dst].set(edge_sa)
    eap = jnp.zeros((H, n_edges, n_edges), jnp.float32).at[
        :, lg_src, lg_dst].set(node_sa[:, g_dst[lg_src]])

    if message_aggregation_type == "mean":
        ndeg = jnp.zeros((n_nodes,), jnp.float32).at[g_dst].add(1.0)
        nap = nap * jnp.where(ndeg > 0, 1.0 / jnp.maximum(ndeg, 1.0),
                              0.0)[None, :, None]
        edeg = jnp.zeros((n_edges,), jnp.float32).at[lg_dst].add(1.0)
        eap = eap * jnp.where(edeg > 0, 1.0 / jnp.maximum(edeg, 1.0),
                              0.0)[None, :, None]

    node_emb = jnp.einsum("hij,hjf->hif", nap, node_val) * node_val
    edge_emb = jnp.einsum("hij,hjf->hif", eap, edge_val) * edge_val
    if head_pooling_type == "sum":
        return node_emb.sum(0), edge_emb.sum(0)
    return node_emb.mean(0), edge_emb.mean(0)


def _init_linear(key, in_feats, out_feats, activation):
    # PyTorch nn.Linear default init: U(-1/sqrt(in), 1/sqrt(in)) for W and b.
    kw, kb = jax.random.split(key)
    bound = 1.0 / math.sqrt(in_feats)
    return {
        "w": jax.random.uniform(kw, (out_feats, in_feats), jnp.float32, -bound, bound),
        "b": jax.random.uniform(kb, (out_feats,), jnp.float32, -bound, bound),
        "activation": activation,
    }


if __name__ == "__main__":
    num_nodes, num_edges = 16, 32
    node_in_feats, edge_in_feats, num_heads = 8, 8, 4
    message_aggregation_type, head_pooling_type = "sum", "mean"
    activation = "relu"           # linear_projection_activation

    key = jax.random.PRNGKey(0)
    k_graph, k_node, k_edge, k_w, k_test = jax.random.split(key, 5)

    # Deterministic random graph: `num_edges` distinct (src, dst) pairs.
    perm = jax.random.permutation(k_graph, num_nodes * num_nodes)[:num_edges]
    g_src_np = np.asarray(perm // num_nodes, dtype=np.int32)
    g_dst_np = np.asarray(perm % num_nodes, dtype=np.int32)
    g_adj_np = np.zeros((num_nodes, num_nodes), np.float32)
    g_adj_np[g_src_np, g_dst_np] = 1.0

    # Line graph: lg node = g edge; lg edge a->b iff dst(a) == src(b).
    lg_src_l, lg_dst_l = [], []
    for a in range(num_edges):
        for bb in range(num_edges):
            if g_dst_np[a] == g_src_np[bb]:
                lg_src_l.append(a)
                lg_dst_l.append(bb)
    lg_src_np = np.asarray(lg_src_l, dtype=np.int32)
    lg_dst_np = np.asarray(lg_dst_l, dtype=np.int32)
    lg_adj_np = np.zeros((num_edges, num_edges), np.float32)
    lg_adj_np[lg_src_np, lg_dst_np] = 1.0

    g_src, g_dst = jnp.asarray(g_src_np), jnp.asarray(g_dst_np)
    lg_src, lg_dst = jnp.asarray(lg_src_np), jnp.asarray(lg_dst_np)
    g_adj, lg_adj = jnp.asarray(g_adj_np), jnp.asarray(lg_adj_np)

    node_inputs = jax.random.normal(k_node, (num_nodes, node_in_feats), jnp.float32)
    edge_inputs = jax.random.normal(k_edge, (num_edges, edge_in_feats), jnp.float32)

    keys = jax.random.split(k_w, 8)
    weights = {
        "node_qk1": _init_linear(keys[0], node_in_feats, num_heads * 4, activation),
        "node_qk2": _init_linear(keys[1], num_heads * 4, num_heads, activation),
        "node_val1": _init_linear(keys[2], node_in_feats,
                                  num_heads * node_in_feats * 4, activation),
        "node_val2": _init_linear(keys[3], num_heads * node_in_feats * 4,
                                  num_heads * node_in_feats, activation),
        "edge_qk1": _init_linear(keys[4], edge_in_feats, num_heads * 4, activation),
        "edge_qk2": _init_linear(keys[5], num_heads * 4, num_heads, activation),
        "edge_val1": _init_linear(keys[6], edge_in_feats,
                                  num_heads * edge_in_feats * 4, activation),
        "edge_val2": _init_linear(keys[7], num_heads * edge_in_feats * 4,
                                  num_heads * edge_in_feats, activation),
    }

    kwargs = dict(num_heads=num_heads, node_in_feats=node_in_feats,
                  edge_in_feats=edge_in_feats,
                  message_aggregation_type=message_aggregation_type,
                  head_pooling_type=head_pooling_type)

    # Fast path: bf16 MXU operands, f32 accumulation / epilogue.
    node_emb, edge_emb = mutual_multi_attention_head_forward(
        g_adj, lg_adj, g_src, g_dst, lg_src, lg_dst,
        node_inputs, edge_inputs, weights,
        compute_dtype=jnp.bfloat16, **kwargs)
    node_emb, edge_emb = jax.block_until_ready((node_emb, edge_emb))

    # f32 path + pure-JAX reference for a strict numerical check.
    node_f32, edge_f32 = mutual_multi_attention_head_forward(
        g_adj, lg_adj, g_src, g_dst, lg_src, lg_dst,
        node_inputs, edge_inputs, weights,
        compute_dtype=jnp.float32, **kwargs)
    with jax.default_matmul_precision("highest"):
        node_ref, edge_ref = reference_forward(
            g_adj, lg_adj, g_src, g_dst, lg_src, lg_dst,
            node_inputs, edge_inputs, weights, **kwargs)

    assert node_emb.shape == (num_nodes, node_in_feats)
    assert edge_emb.shape == (num_edges, edge_in_feats)
    assert jnp.allclose(node_f32, node_ref, atol=2e-3, rtol=2e-3)
    assert jnp.allclose(edge_f32, edge_ref, atol=2e-3, rtol=2e-3)
    assert bool(jnp.all(jnp.isfinite(node_emb))) and bool(jnp.all(jnp.isfinite(edge_emb)))
    assert float(jnp.max(jnp.abs(node_emb - node_ref))) < 5e-2
    assert float(jnp.max(jnp.abs(edge_emb - edge_ref))) < 5e-2

    # Also exercise the K-tiled (multi-step accumulation) path of the linear kernel.
    kt1, kt2, kt3 = jax.random.split(k_test, 3)
    xt = jax.random.normal(kt1, (64, 256), jnp.float32)
    wt = jax.random.uniform(kt2, (128, 256), jnp.float32, -0.0625, 0.0625)
    bt = jax.random.uniform(kt3, (128,), jnp.float32, -0.0625, 0.0625)
    yt = linear_block(xt, wt, bt, activation="relu",
                      compute_dtype=jnp.float32, tk_override=128)
    with jax.default_matmul_precision("highest"):
        yt_ref = jnp.maximum(xt @ wt.T + bt, 0.0)
    assert jnp.allclose(yt, yt_ref, atol=2e-3, rtol=2e-3)

    print("KERNEL_OK")
</pallas_src>

<mosaic_0001>
module attributes {stable_mosaic.version = 11 : i64} {
  func.func @_linear_kernel_single_k(%arg0: i32, %arg1: i32, %arg2: i32, %arg3: memref<16x16xbf16, #tpu.memory_space<vmem>>, %arg4: memref<16x128xbf16, #tpu.memory_space<vmem>>, %arg5: memref<3x128xf32, #tpu.memory_space<vmem>>, %arg6: memref<16x128xf32, #tpu.memory_space<vmem>>) attributes {dimension_semantics = [#tpu.dimension_semantics<parallel>, #tpu.dimension_semantics<parallel>, #tpu.dimension_semantics<arbitrary>], iteration_bounds = array<i64: 1, 1, 1>, scalar_prefetch = 0 : i64, scratch_operands = 0 : i64, tpu.core_type = #tpu.core_type<tc>, window_params = [{transform_indices = @transform_0, window_bounds = array<i64: 16, 16>}, {transform_indices = @transform_1, window_bounds = array<i64: 16, 128>}, {transform_indices = @transform_2, window_bounds = array<i64: 3, 128>}, {transform_indices = @transform_3, window_bounds = array<i64: 16, 128>}]} {
    %c0 = arith.constant 0 : index
    %c0_0 = arith.constant 0 : index
    %0 = vector.load %arg3[%c0, %c0_0] : memref<16x16xbf16, #tpu.memory_space<vmem>>, vector<16x16xbf16>
    %c0_1 = arith.constant 0 : index
    %c0_2 = arith.constant 0 : index
    %1 = vector.load %arg4[%c0_1, %c0_2] : memref<16x128xbf16, #tpu.memory_space<vmem>>, vector<16x128xbf16>
    %cst = arith.constant dense<0.000000e+00> : vector<16x128xf32>
    %2 = tpu.matmul %0, %1, %cst {dimension_numbers = #tpu.dot_dimension_numbers<[1], [0], [0], [1], [0, 0, 1, 1], [], []>} : vector<16x16xbf16>, vector<16x128xbf16>, vector<16x128xf32> -> vector<16x128xf32>
    %c0_3 = arith.constant 0 : index
    %c0_4 = arith.constant 0 : index
    %3 = vector.load %arg5[%c0_3, %c0_4] : memref<3x128xf32, #tpu.memory_space<vmem>>, vector<3x128xf32>
    %4 = vector.extract_strided_slice %3 {offsets = [0, 0], sizes = [1, 128], strides = [1, 1]} : vector<3x128xf32> to vector<1x128xf32>
    %5 = vector.broadcast %4 : vector<1x128xf32> to vector<16x128xf32>
    %6 = arith.addf %2, %5 : vector<16x128xf32>
    %c0_5 = arith.constant 0 : index
    %c0_6 = arith.constant 0 : index
    %7 = vector.load %arg6[%c0_5, %c0_6] : memref<16x128xf32, #tpu.memory_space<vmem>>, vector<16x128xf32>
    tpu.vector_store %arg6[%c0_5, %c0_6], %6 {strides = array<i32>} : memref<16x128xf32, #tpu.memory_space<vmem>>, vector<16x128xf32>,
    return
  }
  func.func @transform_0(%arg0: i32, %arg1: i32, %arg2: i32) -> (i32, i32) {
    %c0_i32 = arith.constant 0 : i32
    return %arg0, %arg2 : i32, i32
  }
  func.func @transform_1(%arg0: i32, %arg1: i32, %arg2: i32) -> (i32, i32) {
    %c0_i32 = arith.constant 0 : i32
    return %arg2, %arg1 : i32, i32
  }
  func.func @transform_2(%arg0: i32, %arg1: i32, %arg2: i32) -> (i32, i32) {
    %c0_i32 = arith.constant 0 : i32
    %c0_i32_0 = arith.constant 0 : i32
    return %c0_i32, %arg1 : i32, i32
  }
  func.func @transform_3(%arg0: i32, %arg1: i32, %arg2: i32) -> (i32, i32) {
    %c0_i32 = arith.constant 0 : i32
    return %arg0, %arg1 : i32, i32
  }
}

</mosaic_0001>

<llo_original>
// kernel: tpu_custom_call.1
$region0: #{tpu_custom_call.1}
  #allocation0 [shape = 'u32[]', space=smem, size = 0x4, offset = 0x4, fixed_abs, tag = 'smem constant byte address 0x4 - core index']
  #allocation1 [shape = 'u32[144,128]{1,0:T(1,128)}', space=vmem, size = 0x12000, scoped, tag = 'internal scratch']
  %s0 = inlined_call_operand.hbm [shape: bf16[16,16], index: 0, kind: input, shape index: {}]
  %s1 = inlined_call_operand.hbm [shape: bf16[16,128], index: 1, kind: input, shape index: {}]
  %s2 = inlined_call_operand.hbm [shape: f32[3,128], index: 2, kind: input, shape index: {}]
  %s3 = inlined_call_operand.hbm [shape: f32[16,128], index: 3, kind: output, shape index: {}]
  %s4 = sld [smem:[#allocation0]]
  $region34: #{tpu_custom_call.1} parent=0
    _
  %s6 = ssub.s32 1, %s4
  %s7 = scalar_select 0, %s6, %s4
  $region1: #{tpu_custom_call.1} parent=0
    #allocation2 [shape = 'u8[4096]{0}', space=vmem, size = 0x1000, scoped, tag = 'input window, operand 0, single buffered']
    #allocation3 [shape = 's32[1]{0}', space=sflag, size = 0x4, scoped, tag = 'scoped memory for tpu_custom_call.1']
    #allocation4 [shape = 's32[1]{0}', space=sflag, size = 0x4, scoped, tag = 'scoped memory for tpu_custom_call.1']
    #allocation5 [shape = 'u8[4096]{0}', space=vmem, size = 0x1000, scoped, tag = 'input window, operand 1, single buffered']
    #allocation6 [shape = 's32[1]{0}', space=sflag, size = 0x4, scoped, tag = 'scoped memory for tpu_custom_call.1']
    #allocation7 [shape = 'u8[2048]{0}', space=vmem, size = 0x800, scoped, tag = 'input window, operand 2, single buffered']
    #allocation8 [shape = 'u8[8192]{0}', space=vmem, size = 0x2000, scoped, tag = 'output window, operand 0, single buffered']
    %8 = vsyncpa [#allocation3], 0
    %9 = vsyncpa [#allocation6], 0
    %10 = vsyncpa [#allocation4], 0
    // Predicated region
    $region2: #{tpu_custom_call.1} parent=1 // pred_check
      _
    $region3: #{tpu_custom_call.1} parent=1 // pred_check_branch
      %12 = sbr.rel (0) target = $region5
    $region4: #{tpu_custom_call.1} parent=1 // pred_region
      %s14 = ssub.s32 128, 128
      %15 = vsyncadd [#allocation3], %s14
      %s16 = sshll.u32 [#allocation2], 4
      %s17 = int_to_ptr.vmem [resolvable:$true] %s16
      %22 = dma.hbm_to_vmem [thread:$0]  %s0, 128, %s17, [#allocation3], 64, 64, 4
    $region5: #{tpu_custom_call.1} parent=1 // pred_fallthru
      _
    // Predicated region
    $region6: #{tpu_custom_call.1} parent=1 // pred_check
      _
    $region7: #{tpu_custom_call.1} parent=1 // pred_check_branch
      %24 = sbr.rel (0) target = $region9
    $region8: #{tpu_custom_call.1} parent=1 // pred_region
      %s26 = ssub.s32 128, 128
      %27 = vsyncadd [#allocation6], %s26
      %s28 = sshll.u32 [#allocation5], 4
      %s29 = int_to_ptr.vmem [resolvable:$true] %s28
      %34 = dma.hbm_to_vmem [thread:$0]  %s1, 128, %s29, [#allocation6], 64, 64, 4
    $region9: #{tpu_custom_call.1} parent=1 // pred_fallthru
      _
    // Predicated region
    $region10: #{tpu_custom_call.1} parent=1 // pred_check
      _
    $region11: #{tpu_custom_call.1} parent=1 // pred_check_branch
      %36 = sbr.rel (0) target = $region13
    $region12: #{tpu_custom_call.1} parent=1 // pred_region
      %s38 = ssub.s32 64, 64
      %39 = vsyncadd [#allocation6], %s38
      %s41 = sshll.u32 [#allocation7], 4
      %s42 = int_to_ptr.vmem [resolvable:$true] %s41
      %44 = dma.hbm_to_vmem [thread:$0]  %s2, 64, %s42, [#allocation6]
    $region13: #{tpu_custom_call.1} parent=1 // pred_fallthru
      _
    // Predicated region
    $region14: #{tpu_custom_call.1} parent=1 // pred_check
      _
    $region15: #{tpu_custom_call.1} parent=1 // pred_check_branch
      %46 = sbr.rel (0) target = $region17
    $region16: #{tpu_custom_call.1} parent=1 // pred_region
      %47 = dma.done [#allocation3], 128
    $region17: #{tpu_custom_call.1} parent=1 // pred_fallthru
      _
    // Predicated region
    $region18: #{tpu_custom_call.1} parent=1 // pred_check
      _
    $region19: #{tpu_custom_call.1} parent=1 // pred_check_branch
      %49 = sbr.rel (0) target = $region21
    $region20: #{tpu_custom_call.1} parent=1 // pred_region
      %50 = dma.done [#allocation6], 128
    $region21: #{tpu_custom_call.1} parent=1 // pred_fallthru
      _
    // Predicated region
    $region22: #{tpu_custom_call.1} parent=1 // pred_check
      _
    $region23: #{tpu_custom_call.1} parent=1 // pred_check_branch
      %52 = sbr.rel (0) target = $region25
    $region24: #{tpu_custom_call.1} parent=1 // pred_region
      %53 = dma.done [#allocation6], 64
    $region25: #{tpu_custom_call.1} parent=1 // pred_fallthru
      _
    %v55 = vld [vmem:[#allocation2] sm:$0xf]
    %v56 = vld [vmem:[#allocation2 + $0x4] sm:$0xf]
    %v57 = vld [vmem:[#allocation5] sm:$0xf]
    %v58 = vld [vmem:[#allocation5 + $0x4] sm:$0xf]
    %v59 = vld [vmem:[#allocation7] sm:$0x7]
    %v60 = vlaneseq
    %v61 = vshrl.u32 %v60, 7
    %v62 = vsub.s32 0, %v61
    %v63 = vrot.slane %v59, %v62
    %v66 = vunpack.c.l.b16 %v55
    %v67 = vunpack.c.l.b16 %v56
    %v68 = vpack.c.b16 %v67, %v66
    %v71 = vunpack.c.l.b16 %v57
    %v72 = vunpack.c.l.b16 %v58
    %v73 = vpack.c.b16 %v72, %v71
    %vm75 = vcmask 130048
    %v77 = vsel %vm75, %v68, 0
    %79 = vmatprep.subr.bf16.mxu0 0
    %80 = vmatpush1.bf16.msra.mxu0 0
    %81 = vmatprep.subr.bf16.mxu0 0
    %82 = vmatpush1.bf16.msra.mxu0 0
    %83 = vmatprep.subr.bf16.mxu0 0
    %84 = vmatpush1.bf16.msra.mxu0 0
    %85 = vmatprep.subr.bf16.mxu0 0
    %86 = vmatpush1.bf16.msra.mxu0 0
    %87 = vmatprep.subr.bf16.mxu0 0
    %88 = vmatpush1.bf16.msra.mxu0 0
    %89 = vmatprep.subr.bf16.mxu0 0
    %90 = vmatpush1.bf16.msra.mxu0 0
    %91 = vmatprep.subr.bf16.mxu0 0
    %92 = vmatpush1.bf16.msra.mxu0 0
    %93 = vmatprep.subr.bf16.mxu0 0
    %94 = vmatpush1.bf16.msra.mxu0 %v73
    %95 = vmatprep.subr.bf16.mxu0 0
    %96 = vmatpush2.bf16.msra.mxu0 0
    %97 = vmatprep.subr.bf16.mxu0 0
    %98 = vmatpush2.bf16.msra.mxu0 0
    %99 = vmatprep.subr.bf16.mxu0 0
    %100 = vmatpush2.bf16.msra.mxu0 0
    %101 = vmatprep.subr.bf16.mxu0 0
    %102 = vmatpush2.bf16.msra.mxu0 0
    %103 = vmatprep.subr.bf16.mxu0 0
    %104 = vmatpush2.bf16.msra.mxu0 0
    %105 = vmatprep.subr.bf16.mxu0 0
    %106 = vmatpush2.bf16.msra.mxu0 0
    %107 = vmatprep.subr.bf16.mxu0 0
    %108 = vmatpush2.bf16.msra.mxu0 0
    %109 = vmatprep.subr.bf16.mxu0 0
    %110 = vmatpush2.bf16.msra.mxu0 0
    %111 = vmatprep.mubr.bf16.mxu0 0
    %112 = vmatmul.mubr.bf16.gmra.mxu0 %v77
    %v113 = vpop.f32.mrf.mxu0
    %v114 = vadd.f32 %v63, %v113
    %v115 = vpop.f32.mrf.mxu0
    %v116 = vpop.f32.mrf.mxu0
    %v117 = vadd.f32 %v63, %v116
    %v118 = vpop.f32.mrf.mxu0
    %119 = vdwg.mxu0
    %120 = vst [vmem:[#allocation8] sm:$0xff] %v114
    %121 = vst [vmem:[#allocation8 + $0x8] sm:$0xff] %v117
    // Predicated region
    $region26: #{tpu_custom_call.1} parent=1 // pred_check
      _
    $region27: #{tpu_custom_call.1} parent=1 // pred_check_branch
      %123 = sbr.rel (0) target = $region29
    $region28: #{tpu_custom_call.1} parent=1 // pred_region
      %s125 = ssub.s32 256, 256
      %126 = vsyncadd [#allocation4], %s125
      %s127 = sshll.u32 [#allocation8], 4
      %s128 = int_to_ptr.vmem [resolvable:$true] %s127
      %133 = dma.vmem_to_hbm [thread:$0]  %s128, 256, %s3, [#allocation4], 128, 128, 8
    $region29: #{tpu_custom_call.1} parent=1 // pred_fallthru
      _
    // Predicated region
    $region30: #{tpu_custom_call.1} parent=1 // pred_check
      _
    $region31: #{tpu_custom_call.1} parent=1 // pred_check_branch
      %135 = sbr.rel (0) target = $region33
    $region32: #{tpu_custom_call.1} parent=1 // pred_region
      %136 = dma.done [#allocation4], 256
    $region33: #{tpu_custom_call.1} parent=1 // pred_fallthru
      _
    %137 = vsyncpa [#allocation3], 1
    %138 = vsyncpa [#allocation6], 1
    %139 = vsyncpa [#allocation4], 1

</llo_original>
